<compile_context>
chip_gen: v5e
topology: v5e:2x2
jax: 0.10.0
libtpu: 0.0.40
codegen_flags: <defaults>
</compile_context>

<pallas_src>
from functools import partial

import jax
import jax.numpy as jnp
from jax.experimental import pallas as pl
from jax.experimental.pallas import tpu as pltpu


def attention_kernel(x_ref, wqkv_ref, bqkv_ref, wd_ref, bd_ref, o_ref, pack_ref, *,
                     heads, dhead):
    # x_ref block: (1, seq, dmodel) -> one batch element per grid step.
    x = x_ref[0]                                    # (seq, dmodel), native dtype
    dtype = x.dtype
    hd = heads * dhead

    # ---- Fused QKV projection: one full-width MXU matmul, f32 accumulation ----
    # 1/sqrt(dhead) is already folded into the Wq / bq columns (wrapper-side).
    qkv = jnp.dot(x, wqkv_ref[...], preferred_element_type=jnp.float32)  # (seq, 3*hd) f32
    qkv = qkv + bqkv_ref[...]                        # bias add once (f32 broadcast)

    q_all = qkv[:, 0 * hd:1 * hd].astype(dtype)      # back to native dtype for MXU
    k_all = qkv[:, 1 * hd:2 * hd].astype(dtype)
    v_all = qkv[:, 2 * hd:3 * hd].astype(dtype)

    # ---- Repack to head-leading (heads, seq, dhead) via VMEM scratch ----
    # Small (seq, dhead) copies; all the (seq, seq)-heavy math below is batched.
    for h in range(heads):
        lo = h * dhead
        pack_ref[0, h] = q_all[:, lo:lo + dhead]
        pack_ref[1, h] = k_all[:, lo:lo + dhead]
        pack_ref[2, h] = v_all[:, lo:lo + dhead]
    q3 = pack_ref[0]                                 # (heads, seq, dhead)
    k3 = pack_ref[1]
    v3 = pack_ref[2]

    # ---- Batched scaled-dot-product attention over all heads ----
    # 'hqd,hkd->hqk' folds the K transpose into the contraction (no explicit .T).
    s = jnp.einsum('hqd,hkd->hqk', q3, k3,
                   preferred_element_type=jnp.float32)        # (heads, seq, seq) f32
    s = s - jnp.max(s, axis=-1, keepdims=True)
    p = jnp.exp(s)
    l = jnp.sum(p, axis=-1, keepdims=True)                    # (heads, seq, 1)

    # Un-normalized PV matmul; normalize afterwards on the small (heads, seq, dhead)
    # output instead of the (heads, seq, seq) probabilities.
    o = jnp.einsum('hqk,hkd->hqd', p.astype(dtype), v3,
                   preferred_element_type=jnp.float32)        # (heads, seq, dhead) f32
    o = o * pl.reciprocal(l, approx=True)                     # EUP slot

    # ---- Single output-combine matmul (K = heads*dhead, N = dmodel) ----
    o_cat = jnp.concatenate([o[h] for h in range(heads)], axis=-1).astype(dtype)  # (seq, hd)
    out = jnp.dot(o_cat, wd_ref[...], preferred_element_type=jnp.float32)
    out = out + bd_ref[...]                                   # (seq, dmodel)

    o_ref[0] = out.astype(o_ref.dtype)


def attention_forward(x, params, heads, dhead, *, vmem_limit_bytes=None):
    batch, seq, dmodel = x.shape
    wq, bq, wk, bk, wv, bv, wd, bd = params
    hd = heads * dhead
    scale = 1.0 / (dhead ** 0.5)

    # Fold the softmax scale into Wq/bq (free weight transform), then pack the three
    # projections into one fused weight / bias (wrapper-side, cheap).
    wqkv = jnp.concatenate([wq * scale, wk, wv], axis=1).astype(x.dtype)       # (dmodel, 3*hd)
    bqkv = jnp.concatenate([bq * scale, bk, bv], axis=1).astype(jnp.float32)   # (1, 3*hd)
    wd_x = wd.astype(x.dtype)                                                  # (hd, dmodel)
    bd_f32 = bd.astype(jnp.float32)                                            # (1, dmodel)

    kernel = partial(attention_kernel, heads=heads, dhead=dhead)
    full2d = lambda shape: pl.BlockSpec(shape, lambda b: (0, 0))

    if vmem_limit_bytes is None:
        itm = jnp.dtype(x.dtype).itemsize
        blocks = 2 * 2 * seq * dmodel * itm                          # x/out blocks (double-buffered)
        weights = 2 * (dmodel * 3 * hd * itm + hd * dmodel * itm
                       + 3 * hd * 4 + dmodel * 4)                    # weights/biases (double-buffered)
        interm = (seq * 3 * hd * 4                                   # f32 qkv
                  + 2 * heads * seq * seq * 4                        # scores + probs (f32)
                  + heads * seq * dhead * 4                          # f32 PV output
                  + 3 * heads * seq * dhead * itm                    # head-packed scratch
                  + seq * dmodel * 4)                                # f32 combine output
        vmem_limit_bytes = int(min(max(2 * (blocks + weights + interm),
                                       16 * 1024 * 1024),
                                   64 * 1024 * 1024))

    return pl.pallas_call(
        kernel,
        out_shape=jax.ShapeDtypeStruct((batch, seq, dmodel), x.dtype),
        grid=(batch,),
        in_specs=[
            pl.BlockSpec((1, seq, dmodel), lambda b: (b, 0, 0)),     # x
            full2d((dmodel, 3 * hd)),                                # fused Wqkv (scale folded)
            full2d((1, 3 * hd)),                                     # fused bqkv (f32)
            full2d((hd, dmodel)),                                    # Wd
            full2d((1, dmodel)),                                     # bd (f32)
        ],
        out_specs=pl.BlockSpec((1, seq, dmodel), lambda b: (b, 0, 0)),
        scratch_shapes=[pltpu.VMEM((3, heads, seq, dhead), x.dtype)],
        compiler_params=pltpu.CompilerParams(
            dimension_semantics=("parallel",),
            vmem_limit_bytes=vmem_limit_bytes),
    )(x, wqkv, bqkv, wd_x, bd_f32)


def reference_forward(x, params, heads, dhead):
    # Pure-JAX reference mirroring the PyTorch module semantics.
    wq, bq, wk, bk, wv, bv, wd, bd = params
    batch, seq, dmodel = x.shape
    xf = x.astype(jnp.float32)

    def proj(w, b):
        y = jnp.einsum('bld,dk->blk', xf, w.astype(jnp.float32)) + b.astype(jnp.float32)[0]
        return y.reshape(batch, seq, heads, dhead)

    q = proj(wq, bq)
    k = proj(wk, bk)
    v = proj(wv, bv)
    a = jnp.einsum('blhd,bLhd->bhlL', q, k) * (1.0 / dhead ** 0.5)
    a = jax.nn.softmax(a, axis=-1)
    pre = jnp.einsum('bhlL,bLhd->blhd', a, v)
    out = jnp.einsum('blhk,hkm->blm',
                     pre, wd.astype(jnp.float32).reshape(heads, dhead, dmodel))
    out = out + bd.astype(jnp.float32)[0]
    return out.astype(x.dtype)


if __name__ == "__main__":
    batch, seq, dmodel, heads = 2, 8, 32, 4
    dhead = dmodel // heads
    hd = heads * dhead

    key = jax.random.PRNGKey(0)
    ks = jax.random.split(key, 9)
    x = jax.random.normal(ks[0], (batch, seq, dmodel), jnp.float32)

    # Deterministic parameter init (EinMix weight/bias shapes, flattened).
    s = 1.0 / jnp.sqrt(jnp.float32(dmodel))
    wq = jax.random.normal(ks[1], (dmodel, hd), jnp.float32) * s
    wk = jax.random.normal(ks[2], (dmodel, hd), jnp.float32) * s
    wv = jax.random.normal(ks[3], (dmodel, hd), jnp.float32) * s
    wd = jax.random.normal(ks[4], (hd, dmodel), jnp.float32) * (1.0 / jnp.sqrt(jnp.float32(hd)))
    bq = jax.random.normal(ks[5], (1, hd), jnp.float32) * 0.01
    bk = jax.random.normal(ks[6], (1, hd), jnp.float32) * 0.01
    bv = jax.random.normal(ks[7], (1, hd), jnp.float32) * 0.01
    bd = jax.random.normal(ks[8], (1, dmodel), jnp.float32) * 0.01

    params = (wq, bq, wk, bk, wv, bv, wd, bd)

    out = attention_forward(x, params, heads, dhead)
    out = jax.block_until_ready(out)

    ref = reference_forward(x, params, heads, dhead)
    assert out.shape == (batch, seq, dmodel)
    # Tolerance accounts for the EUP approximate reciprocal in the softmax
    # normalization (pl.reciprocal(..., approx=True)); use approx=False for
    # bit-tighter parity at negligible cost.
    assert jnp.allclose(out, ref, atol=2e-3, rtol=2e-3), "mismatch vs reference"

    print("KERNEL_OK")
</pallas_src>

<mosaic_0001>
module attributes {stable_mosaic.version = 11 : i64} {
  func.func @attention_kernel(%arg0: i32, %arg1: memref<1x8x32xf32, #tpu.memory_space<vmem>>, %arg2: memref<32x96xf32, #tpu.memory_space<vmem>>, %arg3: memref<1x96xf32, #tpu.memory_space<vmem>>, %arg4: memref<32x32xf32, #tpu.memory_space<vmem>>, %arg5: memref<1x32xf32, #tpu.memory_space<vmem>>, %arg6: memref<1x8x32xf32, #tpu.memory_space<vmem>>, %arg7: memref<3x4x8x8xf32, #tpu.memory_space<vmem>>) attributes {dimension_semantics = [#tpu.dimension_semantics<parallel>], iteration_bounds = array<i64: 2>, scalar_prefetch = 0 : i64, scratch_operands = 1 : i64, tpu.core_type = #tpu.core_type<tc>, window_params = [{transform_indices = @transform_0, window_bounds = array<i64: 1, 8, 32>}, {pipeline_mode = #tpu.pipeline_mode<synchronous>, transform_indices = @transform_1, window_bounds = array<i64: 32, 96>}, {pipeline_mode = #tpu.pipeline_mode<synchronous>, transform_indices = @transform_2, window_bounds = array<i64: 1, 96>}, {pipeline_mode = #tpu.pipeline_mode<synchronous>, transform_indices = @transform_3, window_bounds = array<i64: 32, 32>}, {pipeline_mode = #tpu.pipeline_mode<synchronous>, transform_indices = @transform_4, window_bounds = array<i64: 1, 32>}, {transform_indices = @transform_5, window_bounds = array<i64: 1, 8, 32>}]} {
    %c0 = arith.constant 0 : index
    %c0_0 = arith.constant 0 : index
    %c0_1 = arith.constant 0 : index
    %0 = vector.load %arg1[%c0, %c0_0, %c0_1] : memref<1x8x32xf32, #tpu.memory_space<vmem>>, vector<1x8x32xf32>
    %1 = vector.shape_cast %0 : vector<1x8x32xf32> to vector<8x32xf32>
    %c0_2 = arith.constant 0 : index
    %c0_3 = arith.constant 0 : index
    %2 = vector.load %arg2[%c0_2, %c0_3] : memref<32x96xf32, #tpu.memory_space<vmem>>, vector<32x96xf32>
    %cst = arith.constant dense<0.000000e+00> : vector<8x96xf32>
    %3 = tpu.matmul %1, %2, %cst {dimension_numbers = #tpu.dot_dimension_numbers<[1], [0], [0], [1], [0, 0, 1, 1], [], []>} : vector<8x32xf32>, vector<32x96xf32>, vector<8x96xf32> -> vector<8x96xf32>
    %c0_4 = arith.constant 0 : index
    %c0_5 = arith.constant 0 : index
    %4 = vector.load %arg3[%c0_4, %c0_5] : memref<1x96xf32, #tpu.memory_space<vmem>>, vector<1x96xf32>
    %5 = vector.broadcast %4 : vector<1x96xf32> to vector<8x96xf32>
    %6 = arith.addf %3, %5 : vector<8x96xf32>
    %7 = vector.extract_strided_slice %6 {offsets = [0, 0], sizes = [8, 32], strides = [1, 1]} : vector<8x96xf32> to vector<8x32xf32>
    %8 = vector.extract_strided_slice %6 {offsets = [0, 32], sizes = [8, 32], strides = [1, 1]} : vector<8x96xf32> to vector<8x32xf32>
    %9 = vector.extract_strided_slice %6 {offsets = [0, 64], sizes = [8, 32], strides = [1, 1]} : vector<8x96xf32> to vector<8x32xf32>
    %10 = vector.extract_strided_slice %7 {offsets = [0, 0], sizes = [8, 8], strides = [1, 1]} : vector<8x32xf32> to vector<8x8xf32>
    %c0_6 = arith.constant 0 : index
    %c0_7 = arith.constant 0 : index
    %c0_8 = arith.constant 0 : index
    %c0_9 = arith.constant 0 : index
    %11 = vector.load %arg7[%c0_6, %c0_7, %c0_8, %c0_9] : memref<3x4x8x8xf32, #tpu.memory_space<vmem>>, vector<1x1x8x8xf32>
    %12 = vector.shape_cast %11 : vector<1x1x8x8xf32> to vector<8x8xf32>
    %13 = vector.shape_cast %10 : vector<8x8xf32> to vector<1x1x8x8xf32>
    tpu.vector_store %arg7[%c0_6, %c0_7, %c0_8, %c0_9], %13 {strides = array<i32>} : memref<3x4x8x8xf32, #tpu.memory_space<vmem>>, vector<1x1x8x8xf32>,
    %14 = vector.extract_strided_slice %8 {offsets = [0, 0], sizes = [8, 8], strides = [1, 1]} : vector<8x32xf32> to vector<8x8xf32>
    %c1 = arith.constant 1 : index
    %c0_10 = arith.constant 0 : index
    %c0_11 = arith.constant 0 : index
    %c0_12 = arith.constant 0 : index
    %15 = vector.load %arg7[%c1, %c0_10, %c0_11, %c0_12] : memref<3x4x8x8xf32, #tpu.memory_space<vmem>>, vector<1x1x8x8xf32>
    %16 = vector.shape_cast %15 : vector<1x1x8x8xf32> to vector<8x8xf32>
    %17 = vector.shape_cast %14 : vector<8x8xf32> to vector<1x1x8x8xf32>
    tpu.vector_store %arg7[%c1, %c0_10, %c0_11, %c0_12], %17 {strides = array<i32>} : memref<3x4x8x8xf32, #tpu.memory_space<vmem>>, vector<1x1x8x8xf32>,
    %18 = vector.extract_strided_slice %9 {offsets = [0, 0], sizes = [8, 8], strides = [1, 1]} : vector<8x32xf32> to vector<8x8xf32>
    %c2 = arith.constant 2 : index
    %c0_13 = arith.constant 0 : index
    %c0_14 = arith.constant 0 : index
    %c0_15 = arith.constant 0 : index
    %19 = vector.load %arg7[%c2, %c0_13, %c0_14, %c0_15] : memref<3x4x8x8xf32, #tpu.memory_space<vmem>>, vector<1x1x8x8xf32>
    %20 = vector.shape_cast %19 : vector<1x1x8x8xf32> to vector<8x8xf32>
    %21 = vector.shape_cast %18 : vector<8x8xf32> to vector<1x1x8x8xf32>
    tpu.vector_store %arg7[%c2, %c0_13, %c0_14, %c0_15], %21 {strides = array<i32>} : memref<3x4x8x8xf32, #tpu.memory_space<vmem>>, vector<1x1x8x8xf32>,
    %22 = vector.extract_strided_slice %7 {offsets = [0, 8], sizes = [8, 8], strides = [1, 1]} : vector<8x32xf32> to vector<8x8xf32>
    %c0_16 = arith.constant 0 : index
    %c1_17 = arith.constant 1 : index
    %c0_18 = arith.constant 0 : index
    %c0_19 = arith.constant 0 : index
    %23 = vector.load %arg7[%c0_16, %c1_17, %c0_18, %c0_19] : memref<3x4x8x8xf32, #tpu.memory_space<vmem>>, vector<1x1x8x8xf32>
    %24 = vector.shape_cast %23 : vector<1x1x8x8xf32> to vector<8x8xf32>
    %25 = vector.shape_cast %22 : vector<8x8xf32> to vector<1x1x8x8xf32>
    tpu.vector_store %arg7[%c0_16, %c1_17, %c0_18, %c0_19], %25 {strides = array<i32>} : memref<3x4x8x8xf32, #tpu.memory_space<vmem>>, vector<1x1x8x8xf32>,
    %26 = vector.extract_strided_slice %8 {offsets = [0, 8], sizes = [8, 8], strides = [1, 1]} : vector<8x32xf32> to vector<8x8xf32>
    %c1_20 = arith.constant 1 : index
    %c1_21 = arith.constant 1 : index
    %c0_22 = arith.constant 0 : index
    %c0_23 = arith.constant 0 : index
    %27 = vector.load %arg7[%c1_20, %c1_21, %c0_22, %c0_23] : memref<3x4x8x8xf32, #tpu.memory_space<vmem>>, vector<1x1x8x8xf32>
    %28 = vector.shape_cast %27 : vector<1x1x8x8xf32> to vector<8x8xf32>
    %29 = vector.shape_cast %26 : vector<8x8xf32> to vector<1x1x8x8xf32>
    tpu.vector_store %arg7[%c1_20, %c1_21, %c0_22, %c0_23], %29 {strides = array<i32>} : memref<3x4x8x8xf32, #tpu.memory_space<vmem>>, vector<1x1x8x8xf32>,
    %30 = vector.extract_strided_slice %9 {offsets = [0, 8], sizes = [8, 8], strides = [1, 1]} : vector<8x32xf32> to vector<8x8xf32>
    %c2_24 = arith.constant 2 : index
    %c1_25 = arith.constant 1 : index
    %c0_26 = arith.constant 0 : index
    %c0_27 = arith.constant 0 : index
    %31 = vector.load %arg7[%c2_24, %c1_25, %c0_26, %c0_27] : memref<3x4x8x8xf32, #tpu.memory_space<vmem>>, vector<1x1x8x8xf32>
    %32 = vector.shape_cast %31 : vector<1x1x8x8xf32> to vector<8x8xf32>
    %33 = vector.shape_cast %30 : vector<8x8xf32> to vector<1x1x8x8xf32>
    tpu.vector_store %arg7[%c2_24, %c1_25, %c0_26, %c0_27], %33 {strides = array<i32>} : memref<3x4x8x8xf32, #tpu.memory_space<vmem>>, vector<1x1x8x8xf32>,
    %34 = vector.extract_strided_slice %7 {offsets = [0, 16], sizes = [8, 8], strides = [1, 1]} : vector<8x32xf32> to vector<8x8xf32>
    %c0_28 = arith.constant 0 : index
    %c2_29 = arith.constant 2 : index
    %c0_30 = arith.constant 0 : index
    %c0_31 = arith.constant 0 : index
    %35 = vector.load %arg7[%c0_28, %c2_29, %c0_30, %c0_31] : memref<3x4x8x8xf32, #tpu.memory_space<vmem>>, vector<1x1x8x8xf32>
    %36 = vector.shape_cast %35 : vector<1x1x8x8xf32> to vector<8x8xf32>
    %37 = vector.shape_cast %34 : vector<8x8xf32> to vector<1x1x8x8xf32>
    tpu.vector_store %arg7[%c0_28, %c2_29, %c0_30, %c0_31], %37 {strides = array<i32>} : memref<3x4x8x8xf32, #tpu.memory_space<vmem>>, vector<1x1x8x8xf32>,
    %38 = vector.extract_strided_slice %8 {offsets = [0, 16], sizes = [8, 8], strides = [1, 1]} : vector<8x32xf32> to vector<8x8xf32>
    %c1_32 = arith.constant 1 : index
    %c2_33 = arith.constant 2 : index
    %c0_34 = arith.constant 0 : index
    %c0_35 = arith.constant 0 : index
    %39 = vector.load %arg7[%c1_32, %c2_33, %c0_34, %c0_35] : memref<3x4x8x8xf32, #tpu.memory_space<vmem>>, vector<1x1x8x8xf32>
    %40 = vector.shape_cast %39 : vector<1x1x8x8xf32> to vector<8x8xf32>
    %41 = vector.shape_cast %38 : vector<8x8xf32> to vector<1x1x8x8xf32>
    tpu.vector_store %arg7[%c1_32, %c2_33, %c0_34, %c0_35], %41 {strides = array<i32>} : memref<3x4x8x8xf32, #tpu.memory_space<vmem>>, vector<1x1x8x8xf32>,
    %42 = vector.extract_strided_slice %9 {offsets = [0, 16], sizes = [8, 8], strides = [1, 1]} : vector<8x32xf32> to vector<8x8xf32>
    %c2_36 = arith.constant 2 : index
    %c2_37 = arith.constant 2 : index
    %c0_38 = arith.constant 0 : index
    %c0_39 = arith.constant 0 : index
    %43 = vector.load %arg7[%c2_36, %c2_37, %c0_38, %c0_39] : memref<3x4x8x8xf32, #tpu.memory_space<vmem>>, vector<1x1x8x8xf32>
    %44 = vector.shape_cast %43 : vector<1x1x8x8xf32> to vector<8x8xf32>
    %45 = vector.shape_cast %42 : vector<8x8xf32> to vector<1x1x8x8xf32>
    tpu.vector_store %arg7[%c2_36, %c2_37, %c0_38, %c0_39], %45 {strides = array<i32>} : memref<3x4x8x8xf32, #tpu.memory_space<vmem>>, vector<1x1x8x8xf32>,
    %46 = vector.extract_strided_slice %7 {offsets = [0, 24], sizes = [8, 8], strides = [1, 1]} : vector<8x32xf32> to vector<8x8xf32>
    %c0_40 = arith.constant 0 : index
    %c3 = arith.constant 3 : index
    %c0_41 = arith.constant 0 : index
    %c0_42 = arith.constant 0 : index
    %47 = vector.load %arg7[%c0_40, %c3, %c0_41, %c0_42] : memref<3x4x8x8xf32, #tpu.memory_space<vmem>>, vector<1x1x8x8xf32>
    %48 = vector.shape_cast %47 : vector<1x1x8x8xf32> to vector<8x8xf32>
    %49 = vector.shape_cast %46 : vector<8x8xf32> to vector<1x1x8x8xf32>
    tpu.vector_store %arg7[%c0_40, %c3, %c0_41, %c0_42], %49 {strides = array<i32>} : memref<3x4x8x8xf32, #tpu.memory_space<vmem>>, vector<1x1x8x8xf32>,
    %50 = vector.extract_strided_slice %8 {offsets = [0, 24], sizes = [8, 8], strides = [1, 1]} : vector<8x32xf32> to vector<8x8xf32>
    %c1_43 = arith.constant 1 : index
    %c3_44 = arith.constant 3 : index
    %c0_45 = arith.constant 0 : index
    %c0_46 = arith.constant 0 : index
    %51 = vector.load %arg7[%c1_43, %c3_44, %c0_45, %c0_46] : memref<3x4x8x8xf32, #tpu.memory_space<vmem>>, vector<1x1x8x8xf32>
    %52 = vector.shape_cast %51 : vector<1x1x8x8xf32> to vector<8x8xf32>
    %53 = vector.shape_cast %50 : vector<8x8xf32> to vector<1x1x8x8xf32>
    tpu.vector_store %arg7[%c1_43, %c3_44, %c0_45, %c0_46], %53 {strides = array<i32>} : memref<3x4x8x8xf32, #tpu.memory_space<vmem>>, vector<1x1x8x8xf32>,
    %54 = vector.extract_strided_slice %9 {offsets = [0, 24], sizes = [8, 8], strides = [1, 1]} : vector<8x32xf32> to vector<8x8xf32>
    %c2_47 = arith.constant 2 : index
    %c3_48 = arith.constant 3 : index
    %c0_49 = arith.constant 0 : index
    %c0_50 = arith.constant 0 : index
    %55 = vector.load %arg7[%c2_47, %c3_48, %c0_49, %c0_50] : memref<3x4x8x8xf32, #tpu.memory_space<vmem>>, vector<1x1x8x8xf32>
    %56 = vector.shape_cast %55 : vector<1x1x8x8xf32> to vector<8x8xf32>
    %57 = vector.shape_cast %54 : vector<8x8xf32> to vector<1x1x8x8xf32>
    tpu.vector_store %arg7[%c2_47, %c3_48, %c0_49, %c0_50], %57 {strides = array<i32>} : memref<3x4x8x8xf32, #tpu.memory_space<vmem>>, vector<1x1x8x8xf32>,
    %c0_51 = arith.constant 0 : index
    %c0_52 = arith.constant 0 : index
    %c0_53 = arith.constant 0 : index
    %c0_54 = arith.constant 0 : index
    %58 = vector.load %arg7[%c0_51, %c0_52, %c0_53, %c0_54] : memref<3x4x8x8xf32, #tpu.memory_space<vmem>>, vector<1x4x8x8xf32>
    %59 = vector.shape_cast %58 : vector<1x4x8x8xf32> to vector<4x8x8xf32>
    %c1_55 = arith.constant 1 : index
    %c0_56 = arith.constant 0 : index
    %c0_57 = arith.constant 0 : index
    %c0_58 = arith.constant 0 : index
    %60 = vector.load %arg7[%c1_55, %c0_56, %c0_57, %c0_58] : memref<3x4x8x8xf32, #tpu.memory_space<vmem>>, vector<1x4x8x8xf32>
    %61 = vector.shape_cast %60 : vector<1x4x8x8xf32> to vector<4x8x8xf32>
    %c2_59 = arith.constant 2 : index
    %c0_60 = arith.constant 0 : index
    %c0_61 = arith.constant 0 : index
    %c0_62 = arith.constant 0 : index
    %62 = vector.load %arg7[%c2_59, %c0_60, %c0_61, %c0_62] : memref<3x4x8x8xf32, #tpu.memory_space<vmem>>, vector<1x4x8x8xf32>
    %63 = vector.shape_cast %62 : vector<1x4x8x8xf32> to vector<4x8x8xf32>
    "tpu.trace_start"() <{level = 10 : i32, message = "hqd,hkd->hqk"}> : () -> ()
    %cst_63 = arith.constant dense<0.000000e+00> : vector<4x8x8xf32>
    %64 = tpu.matmul %59, %61, %cst_63 {dimension_numbers = #tpu.dot_dimension_numbers<[2], [2], [1], [1], [0, 0, 0, 1, 1, 1], [0], [0]>} : vector<4x8x8xf32>, vector<4x8x8xf32>, vector<4x8x8xf32> -> vector<4x8x8xf32>
    "tpu.trace_stop"() : () -> ()
    %cst_64 = arith.constant dense<0xFF800000> : vector<4x8xf32>
    %65 = vector.multi_reduction <maximumf>, %64, %cst_64 [2] : vector<4x8x8xf32> to vector<4x8xf32>
    %66 = vector.shape_cast %65 : vector<4x8xf32> to vector<4x8x1xf32>
    %67 = vector.broadcast %66 : vector<4x8x1xf32> to vector<4x8x8xf32>
    %68 = arith.subf %64, %67 : vector<4x8x8xf32>
    %69 = math.exp %68 : vector<4x8x8xf32>
    %cst_65 = arith.constant dense<0.000000e+00> : vector<4x8xf32>
    %70 = vector.multi_reduction <add>, %69, %cst_65 [2] : vector<4x8x8xf32> to vector<4x8xf32>
    %71 = vector.shape_cast %70 : vector<4x8xf32> to vector<4x8x1xf32>
    "tpu.trace_start"() <{level = 10 : i32, message = "hqk,hkd->hqd"}> : () -> ()
    %cst_66 = arith.constant dense<0.000000e+00> : vector<4x8x8xf32>
    %72 = tpu.matmul %69, %63, %cst_66 {dimension_numbers = #tpu.dot_dimension_numbers<[2], [1], [1], [2], [0, 0, 0, 1, 1, 2], [0], [0]>} : vector<4x8x8xf32>, vector<4x8x8xf32>, vector<4x8x8xf32> -> vector<4x8x8xf32>
    "tpu.trace_stop"() : () -> ()
    %73 = tpu.reciprocal %71 {approx = true} : vector<4x8x1xf32> -> vector<4x8x1xf32>
    %74 = vector.broadcast %73 : vector<4x8x1xf32> to vector<4x8x8xf32>
    %75 = arith.mulf %72, %74 : vector<4x8x8xf32>
    %76 = vector.extract_strided_slice %75 {offsets = [0, 0, 0], sizes = [1, 8, 8], strides = [1, 1, 1]} : vector<4x8x8xf32> to vector<1x8x8xf32>
    %77 = vector.shape_cast %76 : vector<1x8x8xf32> to vector<8x8xf32>
    %78 = vector.extract_strided_slice %75 {offsets = [1, 0, 0], sizes = [1, 8, 8], strides = [1, 1, 1]} : vector<4x8x8xf32> to vector<1x8x8xf32>
    %79 = vector.shape_cast %78 : vector<1x8x8xf32> to vector<8x8xf32>
    %80 = vector.extract_strided_slice %75 {offsets = [2, 0, 0], sizes = [1, 8, 8], strides = [1, 1, 1]} : vector<4x8x8xf32> to vector<1x8x8xf32>
    %81 = vector.shape_cast %80 : vector<1x8x8xf32> to vector<8x8xf32>
    %82 = vector.extract_strided_slice %75 {offsets = [3, 0, 0], sizes = [1, 8, 8], strides = [1, 1, 1]} : vector<4x8x8xf32> to vector<1x8x8xf32>
    %83 = vector.shape_cast %82 : vector<1x8x8xf32> to vector<8x8xf32>
    %84 = tpu.concatenate %77, %79, %81, %83 in 1 : vector<8x8xf32>, vector<8x8xf32>, vector<8x8xf32>, vector<8x8xf32> -> vector<8x32xf32>
    %c0_67 = arith.constant 0 : index
    %c0_68 = arith.constant 0 : index
    %85 = vector.load %arg4[%c0_67, %c0_68] : memref<32x32xf32, #tpu.memory_space<vmem>>, vector<32x32xf32>
    %cst_69 = arith.constant dense<0.000000e+00> : vector<8x32xf32>
    %86 = tpu.matmul %84, %85, %cst_69 {dimension_numbers = #tpu.dot_dimension_numbers<[1], [0], [0], [1], [0, 0, 1, 1], [], []>} : vector<8x32xf32>, vector<32x32xf32>, vector<8x32xf32> -> vector<8x32xf32>
    %c0_70 = arith.constant 0 : index
    %c0_71 = arith.constant 0 : index
    %87 = vector.load %arg5[%c0_70, %c0_71] : memref<1x32xf32, #tpu.memory_space<vmem>>, vector<1x32xf32>
    %88 = vector.broadcast %87 : vector<1x32xf32> to vector<8x32xf32>
    %89 = arith.addf %86, %88 : vector<8x32xf32>
    %c0_72 = arith.constant 0 : index
    %c0_73 = arith.constant 0 : index
    %c0_74 = arith.constant 0 : index
    %90 = vector.load %arg6[%c0_72, %c0_73, %c0_74] : memref<1x8x32xf32, #tpu.memory_space<vmem>>, vector<1x8x32xf32>
    %91 = vector.shape_cast %90 : vector<1x8x32xf32> to vector<8x32xf32>
    %92 = vector.shape_cast %89 : vector<8x32xf32> to vector<1x8x32xf32>
    tpu.vector_store %arg6[%c0_72, %c0_73, %c0_74], %92 {strides = array<i32>} : memref<1x8x32xf32, #tpu.memory_space<vmem>>, vector<1x8x32xf32>,
    return
  }
  func.func @transform_0(%arg0: i32) -> (i32, i32, i32) {
    %c0_i32 = arith.constant 0 : i32
    %c0_i32_0 = arith.constant 0 : i32
    %c0_i32_1 = arith.constant 0 : i32
    return %arg0, %c0_i32, %c0_i32_0 : i32, i32, i32
  }
  func.func @transform_1(%arg0: i32) -> (i32, i32) {
    %c0_i32 = arith.constant 0 : i32
    %c0_i32_0 = arith.constant 0 : i32
    %c0_i32_1 = arith.constant 0 : i32
    return %c0_i32, %c0_i32_0 : i32, i32
  }
  func.func @transform_2(%arg0: i32) -> (i32, i32) {
    %c0_i32 = arith.constant 0 : i32
    %c0_i32_0 = arith.constant 0 : i32
    %c0_i32_1 = arith.constant 0 : i32
    return %c0_i32, %c0_i32_0 : i32, i32
  }
  func.func @transform_3(%arg0: i32) -> (i32, i32) {
    %c0_i32 = arith.constant 0 : i32
    %c0_i32_0 = arith.constant 0 : i32
    %c0_i32_1 = arith.constant 0 : i32
    return %c0_i32, %c0_i32_0 : i32, i32
  }
  func.func @transform_4(%arg0: i32) -> (i32, i32) {
    %c0_i32 = arith.constant 0 : i32
    %c0_i32_0 = arith.constant 0 : i32
    %c0_i32_1 = arith.constant 0 : i32
    return %c0_i32, %c0_i32_0 : i32, i32
  }
  func.func @transform_5(%arg0: i32) -> (i32, i32, i32) {
    %c0_i32 = arith.constant 0 : i32
    %c0_i32_0 = arith.constant 0 : i32
    %c0_i32_1 = arith.constant 0 : i32
    return %arg0, %c0_i32, %c0_i32_0 : i32, i32, i32
  }
}

</mosaic_0001>

<llo_original>
// kernel: tpu_custom_call.1
$region0: #{tpu_custom_call.1}
  #allocation0 [shape = 'u32[]', space=smem, size = 0x4, offset = 0x4, fixed_abs, tag = 'smem constant byte address 0x4 - core index']
  #allocation1 [shape = 'u32[72,128]{1,0:T(1,128)}', space=vmem, size = 0x9000, scoped, tag = 'internal scratch']
  #allocation2 [shape = 'f32[3,4,8,8]{3,2,1,0:T(8,128)}', space=vmem, size = 0xc000, scoped, tag = 'scratch operand']
  %s0 = inlined_call_operand.hbm [shape: f32[2,8,32], index: 0, kind: input, shape index: {}]
  %s1 = inlined_call_operand.hbm [shape: f32[32,96], index: 1, kind: input, shape index: {}]
  %s2 = inlined_call_operand.vmem [shape: f32[1,96], index: 2, kind: input, shape index: {}]
  %s3 = inlined_call_operand.hbm [shape: f32[32,32], index: 3, kind: input, shape index: {}]
  %s4 = inlined_call_operand.vmem [shape: f32[1,32], index: 4, kind: input, shape index: {}]
  %s5 = inlined_call_operand.hbm [shape: f32[2,8,32], index: 5, kind: output, shape index: {}]
  %s6 = sld [smem:[#allocation0]]
  $region65: #{tpu_custom_call.1} parent=0
    _
  %s8 = ssub.s32 1, %s6
  %s9 = scalar_select 0, %s8, %s6
  $region1: #{tpu_custom_call.1} parent=0
    #allocation3 [shape = 'u8[8192]{0}', space=vmem, size = 0x2000, scoped, tag = 'input window, operand 0']
    #allocation4 [shape = 's32[2]{0}', space=sflag, size = 0x8, scoped, tag = 'scoped memory for tpu_custom_call.1']
    #allocation5 [shape = 's32[2]{0}', space=sflag, size = 0x8, scoped, tag = 'scoped memory for tpu_custom_call.1']
    #allocation6 [shape = 'u8[16384]{0}', space=vmem, size = 0x4000, scoped, tag = 'input window, operand 1, single buffered']
    #allocation7 [shape = 's32[1]{0}', space=sflag, size = 0x4, scoped, tag = 'scoped memory for tpu_custom_call.1']
    #allocation8 [shape = 'u8[16384]{0}', space=vmem, size = 0x4000, scoped, tag = 'input window, operand 3, single buffered']
    #allocation9 [shape = 'u8[8192]{0}', space=vmem, size = 0x2000, scoped, tag = 'output window, operand 0']
    %10 = vsyncpa [#allocation4], 0
    %s11 = scalar_lea.sflag [#allocation4], 1
    %12 = vsyncpa %s11, 0
    %13 = vsyncpa [#allocation7], 0
    %14 = vsyncpa [#allocation5], 0
    %s15 = scalar_lea.sflag [#allocation5], 1
    %16 = vsyncpa %s15, 0
    loop: start=0, step=1, limit=4
    $region2: #{tpu_custom_call.1} parent=1 // loop_pre_header
      _
    $region3: #{tpu_custom_call.1} parent=1 // loop_header
      %s18 = sphi 0, %s22
      %p19 = scmp.ge.s32.totalorder %s18, 4
      %s28 = sphi 0, %s30
      %s31 = sphi 0, %s28
      %s32 = sphi 0, %s31
      %s48 = sphi 0, %s32
      %s52 = sphi 0, %s52
      %s54 = sphi 0, %s52
      %s55 = sphi 0, %s54
      %s69 = sphi 0, %s55
      %s73 = sphi 0, %s73
      %s75 = sphi 0, %s73
      %s76 = sphi 0, %s75
      %s90 = sphi 0, %s76
      %s94 = sphi 0, %s94
      %s96 = sphi 0, %s94
      %s97 = sphi 0, %s96
      %s111 = sphi 0, %s97
      %s115 = sphi 0, %s115
      %s117 = sphi 0, %s115
      %s118 = sphi 0, %s117
      %s132 = sphi 0, %s118
      %s138 = sphi 0, %s140
      %s141 = sphi 0, %s138
      %s142 = sphi 0, %s141
      %s158 = sphi 0, %s142
    $region4: #{tpu_custom_call.1} parent=1 // loop_header_branch
      %21 = sbr.rel (%p19) target = $region8
    $region5: #{tpu_custom_call.1} parent=1 // loop_body
      %s23 = ssub.s32 %s18, 1
      %s24 = ssub.s32 %s18, 2
      %s25 = sadd.s32 %s18, 1
      %s26 = ssub.s32 %s18, %s25
      %p27 = scmp.eq.s32.totalorder %s26, 0
      %s29 = sadd.s32 %s28, 1
      %s30 = scalar_select %p27, %s28, %s29
      %p33 = pneg %p27
      %p34 = scmp.eq.s32.totalorder %s18, 1
      %p35 = por %p33, %p34
      %p36 = scmp.ne.s32.totalorder %s28, %s31
      %p37 = scmp.eq.s32.totalorder %s18, 0
      %p38 = por %p36, %p37
      %p39 = scmp.ne.s32.totalorder %s28, %s31
      %p40 = scmp.eq.s32.totalorder %s23, 1
      %p41 = por %p39, %p40
      %p42 = scmp.ne.s32.totalorder %s31, %s32
      %p43 = scmp.eq.s32.totalorder %s23, 0
      %p44 = por %p42, %p43
      %p45 = scmp.ne.s32.totalorder %s31, %s32
      %p46 = scmp.eq.s32.totalorder %s24, 1
      %p47 = por %p45, %p46
      %p49 = scmp.ne.s32.totalorder %s32, %s48
      %p50 = scmp.eq.s32.totalorder %s24, 0
      %p51 = por %p49, %p50
      %s53 = sadd.s32 %s52, 1
      %p56 = scmp.eq.s32.totalorder %s18, 1
      %p57 = scmp.ne.s32.totalorder %s52, %s54
      %p58 = scmp.eq.s32.totalorder %s18, 0
      %p59 = por %p57, %p58
      %p60 = scmp.ne.s32.totalorder %s52, %s54
      %p61 = scmp.eq.s32.totalorder %s23, 1
      %p62 = por %p60, %p61
      %p63 = scmp.ne.s32.totalorder %s54, %s55
      %p64 = scmp.eq.s32.totalorder %s23, 0
      %p65 = por %p63, %p64
      %p66 = scmp.ne.s32.totalorder %s54, %s55
      %p67 = scmp.eq.s32.totalorder %s24, 1
      %p68 = por %p66, %p67
      %p70 = scmp.ne.s32.totalorder %s55, %s69
      %p71 = scmp.eq.s32.totalorder %s24, 0
      %p72 = por %p70, %p71
      %s74 = sadd.s32 %s73, 1
      %p77 = scmp.eq.s32.totalorder %s18, 1
      %p78 = scmp.ne.s32.totalorder %s73, %s75
      %p79 = scmp.eq.s32.totalorder %s18, 0
      %p80 = por %p78, %p79
      %p81 = scmp.ne.s32.totalorder %s73, %s75
      %p82 = scmp.eq.s32.totalorder %s23, 1
      %p83 = por %p81, %p82
      %p84 = scmp.ne.s32.totalorder %s75, %s76
      %p85 = scmp.eq.s32.totalorder %s23, 0
      %p86 = por %p84, %p85
      %p87 = scmp.ne.s32.totalorder %s75, %s76
      %p88 = scmp.eq.s32.totalorder %s24, 1
      %p89 = por %p87, %p88
      %p91 = scmp.ne.s32.totalorder %s76, %s90
      %p92 = scmp.eq.s32.totalorder %s24, 0
      %p93 = por %p91, %p92
      %s95 = sadd.s32 %s94, 1
      %p98 = scmp.eq.s32.totalorder %s18, 1
      %p99 = scmp.ne.s32.totalorder %s94, %s96
      %p100 = scmp.eq.s32.totalorder %s18, 0
      %p101 = por %p99, %p100
      %p102 = scmp.ne.s32.totalorder %s94, %s96
      %p103 = scmp.eq.s32.totalorder %s23, 1
      %p104 = por %p102, %p103
      %p105 = scmp.ne.s32.totalorder %s96, %s97
      %p106 = scmp.eq.s32.totalorder %s23, 0
      %p107 = por %p105, %p106
      %p108 = scmp.ne.s32.totalorder %s96, %s97
      %p109 = scmp.eq.s32.totalorder %s24, 1
      %p110 = por %p108, %p109
      %p112 = scmp.ne.s32.totalorder %s97, %s111
      %p113 = scmp.eq.s32.totalorder %s24, 0
      %p114 = por %p112, %p113
      %s116 = sadd.s32 %s115, 1
      %p119 = scmp.eq.s32.totalorder %s18, 1
      %p120 = scmp.ne.s32.totalorder %s115, %s117
      %p121 = scmp.eq.s32.totalorder %s18, 0
      %p122 = por %p120, %p121
      %p123 = scmp.ne.s32.totalorder %s115, %s117
      %p124 = scmp.eq.s32.totalorder %s23, 1
      %p125 = por %p123, %p124
      %p126 = scmp.ne.s32.totalorder %s117, %s118
      %p127 = scmp.eq.s32.totalorder %s23, 0
      %p128 = por %p126, %p127
      %p129 = scmp.ne.s32.totalorder %s117, %s118
      %p130 = scmp.eq.s32.totalorder %s24, 1
      %p131 = por %p129, %p130
      %p133 = scmp.ne.s32.totalorder %s118, %s132
      %p134 = scmp.eq.s32.totalorder %s24, 0
      %p135 = por %p133, %p134
      %s136 = ssub.s32 %s18, %s25
      %p137 = scmp.eq.s32.totalorder %s136, 0
      %s139 = sadd.s32 %s138, 1
      %s140 = scalar_select %p137, %s138, %s139
      %p143 = pneg %p137
      %p144 = scmp.eq.s32.totalorder %s18, 1
      %p145 = por %p143, %p144
      %p146 = scmp.ne.s32.totalorder %s138, %s141
      %p147 = scmp.eq.s32.totalorder %s18, 0
      %p148 = por %p146, %p147
      %p149 = scmp.ne.s32.totalorder %s138, %s141
      %p150 = scmp.eq.s32.totalorder %s23, 1
      %p151 = por %p149, %p150
      %p152 = scmp.ne.s32.totalorder %s141, %s142
      %p153 = scmp.eq.s32.totalorder %s23, 0
      %p154 = por %p152, %p153
      %p155 = scmp.ne.s32.totalorder %s141, %s142
      %p156 = scmp.eq.s32.totalorder %s24, 1
      %p157 = por %p155, %p156
      %p159 = scmp.ne.s32.totalorder %s142, %s158
      %p160 = scmp.eq.s32.totalorder %s24, 0
      %p161 = por %p159, %p160
      %p162 = scmp.le.s32.totalorder 1, %s18
      %p163 = scmp.lt.s32.totalorder %s18, 3
      %p164 = pnand %p162, %p163
      %p165 = pneg %p164
      // Predicated region
      $region9: #{tpu_custom_call.1} parent=5 // pred_check
        _
      $region10: #{tpu_custom_call.1} parent=5 // pred_check_branch
        %167 = sbr.rel (%p164) target = $region12
      $region11: #{tpu_custom_call.1} parent=5 // pred_region
        %s168 = ssub.s32 %s18, 1
        // Predicated region
        $region13: #{tpu_custom_call.1} parent=11 // pred_check
          %p169 = pneg %p65
        $region14: #{tpu_custom_call.1} parent=11 // pred_check_branch
          %171 = sbr.rel (%p169) target = $region16
        $region15: #{tpu_custom_call.1} parent=11 // pred_region
          %173 = vsyncadd [#allocation7], 0
          %s174 = sshll.u32 %s1, 4
          %s175 = int_to_ptr.hbm [resolvable:$true] %s174
          %s176 = sshll.u32 [#allocation6], 4
          %s177 = int_to_ptr.vmem [resolvable:$true] %s176
          %182 = dma.hbm_to_vmem [thread:$0]  %s175, 512, %s177, [#allocation7], 128, 128, 8
        $region16: #{tpu_custom_call.1} parent=11 // pred_fallthru
          _
        // Predicated region
        $region17: #{tpu_custom_call.1} parent=11 // pred_check
          %p183 = pneg %p86
        $region18: #{tpu_custom_call.1} parent=11 // pred_check_branch
          %185 = sbr.rel (%p183) target = $region20
        $region19: #{tpu_custom_call.1} parent=11 // pred_region
          _
        $region20: #{tpu_custom_call.1} parent=11 // pred_fallthru
          _
        // Predicated region
        $region21: #{tpu_custom_call.1} parent=11 // pred_check
          %p186 = pneg %p107
        $region22: #{tpu_custom_call.1} parent=11 // pred_check_branch
          %188 = sbr.rel (%p186) target = $region24
        $region23: #{tpu_custom_call.1} parent=11 // pred_region
          %190 = vsyncadd [#allocation7], 0
          %s191 = sshll.u32 %s3, 4
          %s192 = int_to_ptr.hbm [resolvable:$true] %s191
          %s193 = sshll.u32 [#allocation8], 4
          %s194 = int_to_ptr.vmem [resolvable:$true] %s193
          %199 = dma.hbm_to_vmem [thread:$0]  %s192, 512, %s194, [#allocation7], 128, 128, 8
        $region24: #{tpu_custom_call.1} parent=11 // pred_fallthru
          _
        // Predicated region
        $region25: #{tpu_custom_call.1} parent=11 // pred_check
          %p200 = pneg %p128
        $region26: #{tpu_custom_call.1} parent=11 // pred_check_branch
          %202 = sbr.rel (%p200) target = $region28
        $region27: #{tpu_custom_call.1} parent=11 // pred_region
          _
        $region28: #{tpu_custom_call.1} parent=11 // pred_fallthru
          _
      $region12: #{tpu_custom_call.1} parent=5 // pred_fallthru
        _
      %p203 = scmp.lt.s32.totalorder %s18, 2
      // Predicated region
      $region29: #{tpu_custom_call.1} parent=5 // pred_check
        %p204 = pneg %p203
      $region30: #{tpu_custom_call.1} parent=5 // pred_check_branch
        %206 = sbr.rel (%p204) target = $region32
      $region31: #{tpu_custom_call.1} parent=5 // pred_region
        // Predicated region
        $region33: #{tpu_custom_call.1} parent=31 // pred_check
          %p207 = pneg %p38
        $region34: #{tpu_custom_call.1} parent=31 // pred_check_branch
          %209 = sbr.rel (%p207) target = $region36
        $region35: #{tpu_custom_call.1} parent=31 // pred_region
          %s210 = sand.u32 %s28, 1
          %s211 = scalar_lea.sflag [#allocation4], %s210
          %s212 = sand.u32 %s28, 1
          %s213 = smul.addr %s212, 8
          %s214 = scalar_lea.vmem [#allocation3], %s213
          %216 = vsyncadd %s211, 0
          %s217 = smul.addr %s18, 8
          %s218 = scalar_lea.hbm %s0, %s217
          %s220 = sshll.u32 %s218, 4
          %s221 = int_to_ptr.hbm [resolvable:$true] %s220
          %s222 = sshll.u32 %s214, 4
          %s223 = int_to_ptr.vmem [resolvable:$true] %s222
          %225 = dma.hbm_to_vmem [thread:$0]  %s221, 128, %s223, %s211
        $region36: #{tpu_custom_call.1} parent=31 // pred_fallthru
          _
      $region32: #{tpu_custom_call.1} parent=5 // pred_fallthru
        _
      %p226 = scmp.le.s32.totalorder 1, %s18
      %p227 = scmp.lt.s32.totalorder %s18, 3
      %p228 = pnand %p226, %p227
      %p229 = pneg %p228
      // Predicated region
      $region37: #{tpu_custom_call.1} parent=5 // pred_check
        _
      $region38: #{tpu_custom_call.1} parent=5 // pred_check_branch
        %231 = sbr.rel (%p228) target = $region40
      $region39: #{tpu_custom_call.1} parent=5 // pred_region
        %s232 = ssub.s32 %s18, 1
        %s233 = sand.u32 %s31, 1
        %s234 = scalar_lea.sflag [#allocation4], %s233
        %s235 = sand.u32 %s31, 1
        %s236 = smul.addr %s235, 8
        %s237 = scalar_lea.vmem [#allocation3], %s236
        // Predicated region
        $region41: #{tpu_custom_call.1} parent=39 // pred_check
          %p238 = pneg %p44
        $region42: #{tpu_custom_call.1} parent=39 // pred_check_branch
          %240 = sbr.rel (%p238) target = $region44
        $region43: #{tpu_custom_call.1} parent=39 // pred_region
          %242 = dma.done %s234, 128
        $region44: #{tpu_custom_call.1} parent=39 // pred_fallthru
          _
        // Predicated region
        $region45: #{tpu_custom_call.1} parent=39 // pred_check
          %p243 = pneg %p65
        $region46: #{tpu_custom_call.1} parent=39 // pred_check_branch
          %245 = sbr.rel (%p243) target = $region48
        $region47: #{tpu_custom_call.1} parent=39 // pred_region
          %247 = dma.done [#allocation7], 512
        $region48: #{tpu_custom_call.1} parent=39 // pred_fallthru
          _
        // Predicated region
        $region49: #{tpu_custom_call.1} parent=39 // pred_check
          %p248 = pneg %p107
        $region50: #{tpu_custom_call.1} parent=39 // pred_check_branch
          %250 = sbr.rel (%p248) target = $region52
        $region51: #{tpu_custom_call.1} parent=39 // pred_region
          %252 = dma.done [#allocation7], 512
        $region52: #{tpu_custom_call.1} parent=39 // pred_fallthru
          _
        %s253 = sand.u32 %s31, 1
        %s254 = scalar_lea.sflag [#allocation4], %s253
        %s255 = sand.u32 %s31, 1
        %s256 = smul.addr %s255, 8
        %s257 = scalar_lea.vmem [#allocation3], %s256
        %p258 = pneg %p44
        %p259 = pneg %p41
        %p260 = pneg %p65
        %p261 = pneg %p62
        %p262 = pneg %p86
        %p263 = pneg %p83
        %p264 = pneg %p107
        %p265 = pneg %p104
        %p266 = pneg %p128
        %p267 = pneg %p125
        %p268 = pneg %p154
        %p269 = pneg %p151
        %s270 = sand.u32 %s141, 1
        %s271 = scalar_lea.sflag [#allocation5], %s270
        %s272 = sand.u32 %s141, 1
        %s273 = smul.addr %s272, 8
        %s274 = scalar_lea.vmem [#allocation9], %s273
        %v275 = vld [vmem:[%s237] sm:$0xff]
        %v276 = vld [vmem:[#allocation6] sm:$0xff]
        %v277 = vld [vmem:[#allocation6 + $0x8] sm:$0xff]
        %v278 = vld [vmem:[#allocation6 + $0x10] sm:$0xff]
        %v279 = vld [vmem:[#allocation6 + $0x18] sm:$0xff]
        %v280 = vld [vmem:[%s2] sm:$0x1]
        %v282 = vperm.slane %v280, 0
        %vm284 = vcmask 261120
        %v286 = vsel %vm284, %v275, 0
        %288 = vmatpush.msra.mxu0 0.0
        %289 = vmatpush.msra.mxu0 0.0
        %290 = vmatpush.msra.mxu0 0.0
        %291 = vmatpush.msra.mxu0 0.0
        %292 = vmatpush.msra.mxu0 0.0
        %293 = vmatpush.msra.mxu0 0.0
        %294 = vmatpush.msra.mxu0 0.0
        %295 = vmatpush.msra.mxu0 0.0
        %296 = vmatpush.msra.mxu0 0.0
        %297 = vmatpush.msra.mxu0 0.0
        %298 = vmatpush.msra.mxu0 0.0
        %299 = vmatpush.msra.mxu0 0.0
        %300 = vmatpush.msra.mxu0 %v279
        %301 = vmatpush.msra.mxu0 %v278
        %302 = vmatpush.msra.mxu0 %v277
        %303 = vmatpush.msra.mxu0 %v276
        %304 = vmatmul.f32.gmra.mxu0 %v286
        %v305 = vpop.f32.mrf.mxu0
        %v306 = vadd.f32 %v282, %v305
        %307 = vdwg.mxu0
        %vm308 = vcmask 64512
        %309 = vst.msk [vmem:[#allocation2] sm:$0xff] %vm308, %v306
        %311 = vrot.lane.b32.xlu0 %v306, 96
        %v312 = vpop.permute.xlu0 %311
        %s314 = scalar_lea.vmem [#allocation2], 32
        %315 = vst.msk [vmem:[%s314] sm:$0xff] %vm308, %v312
        %316 = vrot.lane.b32.xlu0 %v306, 64
        %v317 = vpop.permute.xlu0 %316
        %s319 = scalar_lea.vmem [#allocation2], 64
        %320 = vst.msk [vmem:[%s319] sm:$0xff] %vm308, %v317
        %321 = vrot.lane.b32.xlu0 %v306, 120
        %v322 = vpop.permute.xlu0 %321
        %s324 = scalar_lea.vmem [#allocation2], 8
        %325 = vst.msk [vmem:[%s324] sm:$0xff] %vm308, %v322
        %326 = vrot.lane.b32.xlu0 %v306, 88
        %v327 = vpop.permute.xlu0 %326
        %s329 = scalar_lea.vmem [#allocation2], 40
        %330 = vst.msk [vmem:[%s329] sm:$0xff] %vm308, %v327
        %331 = vrot.lane.b32.xlu0 %v306, 56
        %v332 = vpop.permute.xlu0 %331
        %s334 = scalar_lea.vmem [#allocation2], 72
        %335 = vst.msk [vmem:[%s334] sm:$0xff] %vm308, %v332
        %336 = vrot.lane.b32.xlu0 %v306, 112
        %v337 = vpop.permute.xlu0 %336
        %s339 = scalar_lea.vmem [#allocation2], 16
        %340 = vst.msk [vmem:[%s339] sm:$0xff] %vm308, %v337
        %341 = vrot.lane.b32.xlu0 %v306, 80
        %v342 = vpop.permute.xlu0 %341
        %s344 = scalar_lea.vmem [#allocation2], 48
        %345 = vst.msk [vmem:[%s344] sm:$0xff] %vm308, %v342
        %346 = vrot.lane.b32.xlu0 %v306, 48
        %v347 = vpop.permute.xlu0 %346
        %s349 = scalar_lea.vmem [#allocation2], 80
        %350 = vst.msk [vmem:[%s349] sm:$0xff] %vm308, %v347
        %351 = vrot.lane.b32.xlu0 %v306, 104
        %v352 = vpop.permute.xlu0 %351
        %s354 = scalar_lea.vmem [#allocation2], 24
        %355 = vst.msk [vmem:[%s354] sm:$0xff] %vm308, %v352
        %356 = vrot.lane.b32.xlu0 %v306, 72
        %v357 = vpop.permute.xlu0 %356
        %s359 = scalar_lea.vmem [#allocation2], 56
        %360 = vst.msk [vmem:[%s359] sm:$0xff] %vm308, %v357
        %361 = vrot.lane.b32.xlu0 %v306, 40
        %v362 = vpop.permute.xlu0 %361
        %s364 = scalar_lea.vmem [#allocation2], 88
        %365 = vst.msk [vmem:[%s364] sm:$0xff] %vm308, %v362
        %v366 = vld [vmem:[#allocation2] sm:$0xff]
        %v367 = vld [vmem:[#allocation2 + $0x8] sm:$0xff]
        %v368 = vld [vmem:[#allocation2 + $0x10] sm:$0xff]
        %v369 = vld [vmem:[#allocation2 + $0x18] sm:$0xff]
        %v370 = vld [vmem:[%s314] sm:$0xff]
        %v371 = vld [vmem:[%s314 + $0x8] sm:$0xff]
        %v372 = vld [vmem:[%s314 + $0x10] sm:$0xff]
        %v373 = vld [vmem:[%s314 + $0x18] sm:$0xff]
        %v374 = vld [vmem:[%s319] sm:$0xff]
        %v375 = vld [vmem:[%s319 + $0x8] sm:$0xff]
        %v376 = vld [vmem:[%s319 + $0x10] sm:$0xff]
        %v377 = vld [vmem:[%s319 + $0x18] sm:$0xff]
        %v379 = vsel %vm308, %v366, 0
        %v382 = vsel %vm308, %v370, 0
        %384 = vmatpush.xpose.msra.mxu0 0.0
        %385 = vmatpush.xpose.msra.mxu0 0.0
        %386 = vmatpush.xpose.msra.mxu0 0.0
        %387 = vmatpush.xpose.msra.mxu0 0.0
        %388 = vmatpush.xpose.msra.mxu0 0.0
        %389 = vmatpush.xpose.msra.mxu0 0.0
        %390 = vmatpush.xpose.msra.mxu0 0.0
        %391 = vmatpush.xpose.msra.mxu0 0.0
        %392 = vmatpush.xpose.msra.mxu0 0.0
        %393 = vmatpush.xpose.msra.mxu0 0.0
        %394 = vmatpush.xpose.msra.mxu0 0.0
        %395 = vmatpush.xpose.msra.mxu0 0.0
        %396 = vmatpush.xpose.msra.mxu0 0.0
        %397 = vmatpush.xpose.msra.mxu0 0.0
        %398 = vmatpush.xpose.msra.mxu0 0.0
        %399 = vmatpush.xpose.msra.mxu0 %v382
        %400 = vmatmul.f32.gmra.mxu0 %v379
        %v401 = vpop.f32.mrf.mxu0
        %v402 = vadd.f32 0.0, %v401
        %403 = vdwg.mxu0
        %v405 = vsel %vm308, %v367, 0
        %v408 = vsel %vm308, %v371, 0
        %410 = vmatpush.xpose.msra.mxu0 0.0
        %411 = vmatpush.xpose.msra.mxu0 0.0
        %412 = vmatpush.xpose.msra.mxu0 0.0
        %413 = vmatpush.xpose.msra.mxu0 0.0
        %414 = vmatpush.xpose.msra.mxu0 0.0
        %415 = vmatpush.xpose.msra.mxu0 0.0
        %416 = vmatpush.xpose.msra.mxu0 0.0
        %417 = vmatpush.xpose.msra.mxu0 0.0
        %418 = vmatpush.xpose.msra.mxu0 0.0
        %419 = vmatpush.xpose.msra.mxu0 0.0
        %420 = vmatpush.xpose.msra.mxu0 0.0
        %421 = vmatpush.xpose.msra.mxu0 0.0
        %422 = vmatpush.xpose.msra.mxu0 0.0
        %423 = vmatpush.xpose.msra.mxu0 0.0
        %424 = vmatpush.xpose.msra.mxu0 0.0
        %425 = vmatpush.xpose.msra.mxu0 %v408
        %426 = vmatmul.f32.gmra.mxu0 %v405
        %v427 = vpop.f32.mrf.mxu0
        %v428 = vadd.f32 0.0, %v427
        %429 = vdwg.mxu0
        %v431 = vsel %vm308, %v368, 0
        %v434 = vsel %vm308, %v372, 0
        %436 = vmatpush.xpose.msra.mxu0 0.0
        %437 = vmatpush.xpose.msra.mxu0 0.0
        %438 = vmatpush.xpose.msra.mxu0 0.0
        %439 = vmatpush.xpose.msra.mxu0 0.0
        %440 = vmatpush.xpose.msra.mxu0 0.0
        %441 = vmatpush.xpose.msra.mxu0 0.0
        %442 = vmatpush.xpose.msra.mxu0 0.0
        %443 = vmatpush.xpose.msra.mxu0 0.0
        %444 = vmatpush.xpose.msra.mxu0 0.0
        %445 = vmatpush.xpose.msra.mxu0 0.0
        %446 = vmatpush.xpose.msra.mxu0 0.0
        %447 = vmatpush.xpose.msra.mxu0 0.0
        %448 = vmatpush.xpose.msra.mxu0 0.0
        %449 = vmatpush.xpose.msra.mxu0 0.0
        %450 = vmatpush.xpose.msra.mxu0 0.0
        %451 = vmatpush.xpose.msra.mxu0 %v434
        %452 = vmatmul.f32.gmra.mxu0 %v431
        %v453 = vpop.f32.mrf.mxu0
        %v454 = vadd.f32 0.0, %v453
        %455 = vdwg.mxu0
        %v457 = vsel %vm308, %v369, 0
        %v460 = vsel %vm308, %v373, 0
        %462 = vmatpush.xpose.msra.mxu0 0.0
        %463 = vmatpush.xpose.msra.mxu0 0.0
        %464 = vmatpush.xpose.msra.mxu0 0.0
        %465 = vmatpush.xpose.msra.mxu0 0.0
        %466 = vmatpush.xpose.msra.mxu0 0.0
        %467 = vmatpush.xpose.msra.mxu0 0.0
        %468 = vmatpush.xpose.msra.mxu0 0.0
        %469 = vmatpush.xpose.msra.mxu0 0.0
        %470 = vmatpush.xpose.msra.mxu0 0.0
        %471 = vmatpush.xpose.msra.mxu0 0.0
        %472 = vmatpush.xpose.msra.mxu0 0.0
        %473 = vmatpush.xpose.msra.mxu0 0.0
        %474 = vmatpush.xpose.msra.mxu0 0.0
        %475 = vmatpush.xpose.msra.mxu0 0.0
        %476 = vmatpush.xpose.msra.mxu0 0.0
        %477 = vmatpush.xpose.msra.mxu0 %v460
        %478 = vmatmul.f32.gmra.mxu0 %v457
        %v479 = vpop.f32.mrf.mxu0
        %v480 = vadd.f32 0.0, %v479
        %481 = vdwg.mxu0
        %v482 = vsel %vm308, %v402, -inf
        %483 = vmax.xlane.f32.xlu0 %v482
        %v484 = vpop.xlane.xlu0 %483
        %v485 = vsel %vm308, %v428, -inf
        %486 = vmax.xlane.f32.xlu0 %v485
        %v487 = vpop.xlane.xlu0 %486
        %v488 = vsel %vm308, %v454, -inf
        %489 = vmax.xlane.f32.xlu0 %v488
        %v490 = vpop.xlane.xlu0 %489
        %v491 = vsel %vm308, %v480, -inf
        %492 = vmax.xlane.f32.xlu0 %v491
        %v493 = vpop.xlane.xlu0 %492
        %v494 = vsub.f32 %v402, %v484
        %v495 = vsub.f32 %v428, %v487
        %v496 = vsub.f32 %v454, %v490
        %v497 = vsub.f32 %v480, %v493
        %v498 = vmul.f32 %v494, 1.442695
        %v499 = vpow.pop %v498
        %v500 = vmul.f32 %v495, 1.442695
        %v501 = vpow.pop %v500
        %v502 = vmul.f32 %v496, 1.442695
        %v503 = vpow.pop %v502
        %v504 = vmul.f32 %v497, 1.442695
        %v505 = vpow.pop %v504
        %v506 = vsel %vm308, %v499, 0.0
        %507 = vadd.xlane.f32.xlu0 %v506
        %v508 = vpop.xlane.xlu0 %507
        %v509 = vsel %vm308, %v501, 0.0
        %510 = vadd.xlane.f32.xlu0 %v509
        %v511 = vpop.xlane.xlu0 %510
        %v512 = vsel %vm308, %v503, 0.0
        %513 = vadd.xlane.f32.xlu0 %v512
        %v514 = vpop.xlane.xlu0 %513
        %v515 = vsel %vm308, %v505, 0.0
        %516 = vadd.xlane.f32.xlu0 %v515
        %v517 = vpop.xlane.xlu0 %516
        %v519 = vsel %vm308, %v499, 0
        %521 = vmatpush.msra.mxu0 0.0
        %522 = vmatpush.msra.mxu0 0.0
        %523 = vmatpush.msra.mxu0 0.0
        %524 = vmatpush.msra.mxu0 0.0
        %525 = vmatpush.msra.mxu0 0.0
        %526 = vmatpush.msra.mxu0 0.0
        %527 = vmatpush.msra.mxu0 0.0
        %528 = vmatpush.msra.mxu0 0.0
        %529 = vmatpush.msra.mxu0 0.0
        %530 = vmatpush.msra.mxu0 0.0
        %531 = vmatpush.msra.mxu0 0.0
        %532 = vmatpush.msra.mxu0 0.0
        %533 = vmatpush.msra.mxu0 0.0
        %534 = vmatpush.msra.mxu0 0.0
        %535 = vmatpush.msra.mxu0 0.0
        %536 = vmatpush.msra.mxu0 %v374
        %537 = vmatmul.f32.gmra.mxu0 %v519
        %v538 = vpop.f32.mrf.mxu0
        %v539 = vadd.f32 0.0, %v538
        %540 = vdwg.mxu0
        %v542 = vsel %vm308, %v501, 0
        %544 = vmatpush.msra.mxu0 0.0
        %545 = vmatpush.msra.mxu0 0.0
        %546 = vmatpush.msra.mxu0 0.0
        %547 = vmatpush.msra.mxu0 0.0
        %548 = vmatpush.msra.mxu0 0.0
        %549 = vmatpush.msra.mxu0 0.0
        %550 = vmatpush.msra.mxu0 0.0
        %551 = vmatpush.msra.mxu0 0.0
        %552 = vmatpush.msra.mxu0 0.0
        %553 = vmatpush.msra.mxu0 0.0
        %554 = vmatpush.msra.mxu0 0.0
        %555 = vmatpush.msra.mxu0 0.0
        %556 = vmatpush.msra.mxu0 0.0
        %557 = vmatpush.msra.mxu0 0.0
        %558 = vmatpush.msra.mxu0 0.0
        %559 = vmatpush.msra.mxu0 %v375
        %560 = vmatmul.f32.gmra.mxu0 %v542
        %v561 = vpop.f32.mrf.mxu0
        %v562 = vadd.f32 0.0, %v561
        %563 = vdwg.mxu0
        %v565 = vsel %vm308, %v503, 0
        %567 = vmatpush.msra.mxu0 0.0
        %568 = vmatpush.msra.mxu0 0.0
        %569 = vmatpush.msra.mxu0 0.0
        %570 = vmatpush.msra.mxu0 0.0
        %571 = vmatpush.msra.mxu0 0.0
        %572 = vmatpush.msra.mxu0 0.0
        %573 = vmatpush.msra.mxu0 0.0
        %574 = vmatpush.msra.mxu0 0.0
        %575 = vmatpush.msra.mxu0 0.0
        %576 = vmatpush.msra.mxu0 0.0
        %577 = vmatpush.msra.mxu0 0.0
        %578 = vmatpush.msra.mxu0 0.0
        %579 = vmatpush.msra.mxu0 0.0
        %580 = vmatpush.msra.mxu0 0.0
        %581 = vmatpush.msra.mxu0 0.0
        %582 = vmatpush.msra.mxu0 %v376
        %583 = vmatmul.f32.gmra.mxu0 %v565
        %v584 = vpop.f32.mrf.mxu0
        %v585 = vadd.f32 0.0, %v584
        %586 = vdwg.mxu0
        %v588 = vsel %vm308, %v505, 0
        %590 = vmatpush.msra.mxu0 0.0
        %591 = vmatpush.msra.mxu0 0.0
        %592 = vmatpush.msra.mxu0 0.0
        %593 = vmatpush.msra.mxu0 0.0
        %594 = vmatpush.msra.mxu0 0.0
        %595 = vmatpush.msra.mxu0 0.0
        %596 = vmatpush.msra.mxu0 0.0
        %597 = vmatpush.msra.mxu0 0.0
        %598 = vmatpush.msra.mxu0 0.0
        %599 = vmatpush.msra.mxu0 0.0
        %600 = vmatpush.msra.mxu0 0.0
        %601 = vmatpush.msra.mxu0 0.0
        %602 = vmatpush.msra.mxu0 0.0
        %603 = vmatpush.msra.mxu0 0.0
        %604 = vmatpush.msra.mxu0 0.0
        %605 = vmatpush.msra.mxu0 %v377
        %606 = vmatmul.f32.gmra.mxu0 %v588
        %v607 = vpop.f32.mrf.mxu0
        %v608 = vadd.f32 0.0, %v607
        %609 = vdwg.mxu0
        %v610 = vrcp.pop %v508
        %v611 = vrcp.pop %v511
        %v612 = vrcp.pop %v514
        %v613 = vrcp.pop %v517
        %v614 = vmul.f32 %v539, %v610
        %v615 = vmul.f32 %v562, %v611
        %v616 = vmul.f32 %v585, %v612
        %v617 = vmul.f32 %v608, %v613
        %619 = vrot.lane.b32.xlu0 %v615, 8
        %v620 = vpop.permute.xlu0 %619
        %623 = vrot.lane.b32.xlu0 %v616, 16
        %v624 = vpop.permute.xlu0 %623
        %627 = vrot.lane.b32.xlu0 %v617, 24
        %v628 = vpop.permute.xlu0 %627
        %v630 = vsel %vm308, %v614, %v620
        %vm631 = vcmask 130048
        %v632 = vsel %vm631, %v630, %v624
        %vm633 = vcmask 195584
        %v634 = vsel %vm633, %v632, %v628
        %v635 = vld [vmem:[#allocation8] sm:$0xff]
        %v636 = vld [vmem:[#allocation8 + $0x8] sm:$0xff]
        %v637 = vld [vmem:[#allocation8 + $0x10] sm:$0xff]
        %v638 = vld [vmem:[#allocation8 + $0x18] sm:$0xff]
        %v639 = vld [vmem:[%s4] sm:$0x1]
        %v641 = vperm.slane %v639, 0
        %v644 = vsel %vm284, %v634, 0
        %646 = vmatpush.msra.mxu0 0.0
        %647 = vmatpush.msra.mxu0 0.0
        %648 = vmatpush.msra.mxu0 0.0
        %649 = vmatpush.msra.mxu0 0.0
        %650 = vmatpush.msra.mxu0 0.0
        %651 = vmatpush.msra.mxu0 0.0
        %652 = vmatpush.msra.mxu0 0.0
        %653 = vmatpush.msra.mxu0 0.0
        %654 = vmatpush.msra.mxu0 0.0
        %655 = vmatpush.msra.mxu0 0.0
        %656 = vmatpush.msra.mxu0 0.0
        %657 = vmatpush.msra.mxu0 0.0
        %658 = vmatpush.msra.mxu0 %v638
        %659 = vmatpush.msra.mxu0 %v637
        %660 = vmatpush.msra.mxu0 %v636
        %661 = vmatpush.msra.mxu0 %v635
        %662 = vmatmul.f32.gmra.mxu0 %v644
        %v663 = vpop.f32.mrf.mxu0
        %v664 = vadd.f32 %v641, %v663
        %665 = vdwg.mxu0
        %666 = vst.msk [vmem:[%s274] sm:$0xff] %vm284, %v664
        %s667 = sand.u32 %s141, 1
        %s668 = scalar_lea.sflag [#allocation5], %s667
        %s669 = sand.u32 %s141, 1
        %s670 = smul.addr %s669, 8
        %s671 = scalar_lea.vmem [#allocation9], %s670
        // Predicated region
        $region53: #{tpu_custom_call.1} parent=39 // pred_check
          %p672 = pneg %p151
        $region54: #{tpu_custom_call.1} parent=39 // pred_check_branch
          %674 = sbr.rel (%p672) target = $region56
        $region55: #{tpu_custom_call.1} parent=39 // pred_region
          %676 = vsyncadd %s668, 0
          %s677 = smul.addr %s23, 8
          %s678 = scalar_lea.hbm %s5, %s677
          %s680 = sshll.u32 %s671, 4
          %s681 = int_to_ptr.vmem [resolvable:$true] %s680
          %s682 = sshll.u32 %s678, 4
          %s683 = int_to_ptr.hbm [resolvable:$true] %s682
          %685 = dma.vmem_to_hbm [thread:$0]  %s681, 128, %s683, %s668
        $region56: #{tpu_custom_call.1} parent=39 // pred_fallthru
          _
      $region40: #{tpu_custom_call.1} parent=5 // pred_fallthru
        _
      %p686 = scmp.le.s32.totalorder 2, %s18
      // Predicated region
      $region57: #{tpu_custom_call.1} parent=5 // pred_check
        %p687 = pneg %p686
      $region58: #{tpu_custom_call.1} parent=5 // pred_check_branch
        %689 = sbr.rel (%p687) target = $region60
      $region59: #{tpu_custom_call.1} parent=5 // pred_region
        %s690 = ssub.s32 %s18, 2
        // Predicated region
        $region61: #{tpu_custom_call.1} parent=59 // pred_check
          %p691 = pneg %p157
        $region62: #{tpu_custom_call.1} parent=59 // pred_check_branch
          %693 = sbr.rel (%p691) target = $region64
        $region63: #{tpu_custom_call.1} parent=59 // pred_region
          %s694 = sand.u32 %s142, 1
          %s695 = scalar_lea.sflag [#allocation5], %s694
          %s696 = sand.u32 %s142, 1
          %s697 = smul.addr %s696, 8
          %s698 = scalar_lea.vmem [#allocation9], %s697
          %700 = dma.done %s695, 128
        $region64: #{tpu_custom_call.1} parent=59 // pred_fallthru
          _
      $region60: #{tpu_custom_call.1} parent=5 // pred_fallthru
        _
    $region6: #{tpu_custom_call.1} parent=1 // loop_footer
      %s22 = sadd.s32 1, %s18
    $region7: #{tpu_custom_call.1} parent=1 // loop_footer_branch
      %17 = sbr.rel target = $region3
    $region8: #{tpu_custom_call.1} parent=1 // loop_exit
      _
    %701 = vsyncpa [#allocation4], 1
    %s702 = scalar_lea.sflag [#allocation4], 1
    %703 = vsyncpa %s702, 1
    %704 = vsyncpa [#allocation7], 1
    %705 = vsyncpa [#allocation5], 1
    %s706 = scalar_lea.sflag [#allocation5], 1
    %707 = vsyncpa %s706, 1

</llo_original>
